<compile_context>
chip_gen: v6e
topology: v6e:2x2x1
jax: 0.10.0
libtpu: 0.0.40
codegen_flags: <defaults>
</compile_context>

<pallas_src>
import jax
import jax.numpy as jnp
from jax.experimental import pallas as pl
from jax.experimental.pallas import tpu as pltpu


def _log_sigmoid(z):
    # Numerically stable log-sigmoid (matches F.logsigmoid).
    return jnp.minimum(z, 0.0) - jnp.log1p(jnp.exp(-jnp.abs(z)))


def _hidden_act(z, act):
    if act == "relu":
        return jnp.maximum(z, 0.0)
    if act == "tanh":
        return jnp.tanh(z)
    if act == "logistic":
        return jax.nn.sigmoid(z)
    return z  # identity


def _make_mlp_kernel(num_layers, activation, out_act, include_negative):
    def kernel(x_ref, *refs):
        o_ref = refs[-1]
        wb = refs[:-1]

        h = x_ref[...]  # (TILE_N, d_in) bf16
        for li in range(num_layers):
            w_ref = wb[2 * li]
            b_ref = wb[2 * li + 1]
            # MXU matmul with f32 accumulation; bias add in f32.
            z = jnp.dot(h, w_ref[...], preferred_element_type=jnp.float32)
            z = z + b_ref[...]
            if li < num_layers - 1:
                # Hidden activation; cast back to bf16 for the next MXU pass.
                h = _hidden_act(z, activation).astype(jnp.bfloat16)
            else:
                h = z  # final logits stay f32

        if out_act == "softmax":
            m = jnp.max(h, axis=-1, keepdims=True)
            s = h - m
            out = s - jnp.log(jnp.sum(jnp.exp(s), axis=-1, keepdims=True))
        elif out_act == "logistic":
            if include_negative and h.shape[-1] == 1:
                out = jnp.concatenate(
                    [_log_sigmoid(-h), _log_sigmoid(h)], axis=-1)
            else:
                out = _log_sigmoid(h)
        else:  # identity
            out = h
        o_ref[...] = out.astype(o_ref.dtype)

    return kernel


def wrapped_mlp_forward(x, weights, biases, *, activation="relu",
                        out_act="softmax", include_negative=False,
                        tile_n=1024):
    """Fused _WrappedMLP forward.

    x:       (n, d_in) float array
    weights: list of (d_i, d_{i+1}) arrays (x @ W layout, i.e. sklearn coefs_)
    biases:  list of (d_{i+1},) arrays
    """
    assert out_act in ("identity", "softmax", "logistic")
    n, d_in = x.shape
    num_layers = len(weights)
    c = weights[-1].shape[1]
    c_out = 2 if (out_act == "logistic" and include_negative and c == 1) else c

    # bf16 stream for x / W, f32 accumulate + bias.
    x_bf16 = x.astype(jnp.bfloat16)
    ws = [w.astype(jnp.bfloat16) for w in weights]
    bs = [b.reshape(1, -1).astype(jnp.float32) for b in biases]

    def round_up(a, m):
        return (a + m - 1) // m * m

    # Batch tile: multiple of 8 sublanes; pad batch to the tile if needed.
    tile_n = min(tile_n, round_up(n, 8))
    n_pad = round_up(n, tile_n)
    if n_pad != n:
        x_bf16 = jnp.pad(x_bf16, ((0, n_pad - n), (0, 0)))

    grid = (n_pad // tile_n,)

    in_specs = [pl.BlockSpec((tile_n, d_in), lambda i: (i, 0))]
    args = [x_bf16]
    for w, b in zip(ws, bs):
        # Full-array blocks, constant index_map -> weights resident in VMEM.
        in_specs.append(pl.BlockSpec(w.shape, lambda i: (0, 0)))
        in_specs.append(pl.BlockSpec(b.shape, lambda i: (0, 0)))
        args.append(w)
        args.append(b)

    kernel = _make_mlp_kernel(num_layers, activation, out_act, include_negative)

    # Advisory cost estimate for XLA's scheduler.
    flops = 2 * n_pad * sum(w.shape[0] * w.shape[1] for w in weights)
    bytes_accessed = (x_bf16.size * 2 + n_pad * c_out * 4
                      + sum(w.size * 2 for w in ws) + sum(b.size * 4 for b in bs))
    transcendentals = n_pad * c_out if out_act != "identity" else 0

    out = pl.pallas_call(
        kernel,
        out_shape=jax.ShapeDtypeStruct((n_pad, c_out), jnp.float32),
        grid=grid,
        in_specs=in_specs,
        out_specs=pl.BlockSpec((tile_n, c_out), lambda i: (i, 0)),
        compiler_params=pltpu.CompilerParams(
            dimension_semantics=("parallel",)),
        cost_estimate=pl.CostEstimate(
            flops=flops, transcendentals=transcendentals,
            bytes_accessed=bytes_accessed),
    )(*args)
    return out[:n]


def reference_forward(x, weights, biases, *, activation="relu",
                      out_act="softmax", include_negative=False):
    """Pure-JAX reference using the same bf16-input / f32-accumulate math."""
    h = x.astype(jnp.bfloat16)
    num_layers = len(weights)
    for li, (w, b) in enumerate(zip(weights, biases)):
        z = jnp.dot(h, w.astype(jnp.bfloat16),
                    preferred_element_type=jnp.float32)
        z = z + b.reshape(1, -1).astype(jnp.float32)
        if li < num_layers - 1:
            h = _hidden_act(z, activation).astype(jnp.bfloat16)
        else:
            h = z
    if out_act == "softmax":
        return jax.nn.log_softmax(h, axis=-1)
    if out_act == "logistic":
        if include_negative and h.shape[-1] == 1:
            return jnp.concatenate(
                [jax.nn.log_sigmoid(-h), jax.nn.log_sigmoid(h)], axis=-1)
        return jax.nn.log_sigmoid(h)
    return h


if __name__ == "__main__":
    key = jax.random.PRNGKey(0)
    k_x, k_w1, k_b1, k_w2, k_b2, k_w3, k_b3 = jax.random.split(key, 7)

    # Small shapes consistent with a sklearn MLPClassifier:
    # hidden_layer_sizes=(64, 32), relu hidden activation, softmax output.
    batch, d_in, h1, h2, n_classes = 64, 32, 64, 32, 4

    x = jax.random.normal(k_x, (batch, d_in), dtype=jnp.float32)

    weights = [
        jax.random.normal(k_w1, (d_in, h1), dtype=jnp.float32) * 0.1,
        jax.random.normal(k_w2, (h1, h2), dtype=jnp.float32) * 0.1,
        jax.random.normal(k_w3, (h2, n_classes), dtype=jnp.float32) * 0.1,
    ]
    biases = [
        jax.random.normal(k_b1, (h1,), dtype=jnp.float32) * 0.1,
        jax.random.normal(k_b2, (h2,), dtype=jnp.float32) * 0.1,
        jax.random.normal(k_b3, (n_classes,), dtype=jnp.float32) * 0.1,
    ]

    y = wrapped_mlp_forward(x, weights, biases,
                            activation="relu", out_act="softmax")
    y = jax.block_until_ready(y)

    y_ref = reference_forward(x, weights, biases,
                              activation="relu", out_act="softmax")

    assert y.shape == (batch, n_classes)
    assert bool(jnp.all(jnp.isfinite(y)))
    assert jnp.allclose(y, y_ref, atol=2e-3, rtol=2e-3)

    # TODO(synk): the `include_negative` log-sigmoid concat path is implemented
    # but only exercised when the final layer has a single output unit.

    print("KERNEL_OK")
</pallas_src>

<mosaic_0001>
module attributes {stable_mosaic.version = 11 : i64} {
  func.func @kernel(%arg0: i32, %arg1: memref<64x32xbf16, #tpu.memory_space<vmem>>, %arg2: memref<32x64xbf16, #tpu.memory_space<vmem>>, %arg3: memref<1x64xf32, #tpu.memory_space<vmem>>, %arg4: memref<64x32xbf16, #tpu.memory_space<vmem>>, %arg5: memref<1x32xf32, #tpu.memory_space<vmem>>, %arg6: memref<32x4xbf16, #tpu.memory_space<vmem>>, %arg7: memref<1x4xf32, #tpu.memory_space<vmem>>, %arg8: memref<64x4xf32, #tpu.memory_space<vmem>>) attributes {dimension_semantics = [#tpu.dimension_semantics<parallel>], iteration_bounds = array<i64: 1>, scalar_prefetch = 0 : i64, scratch_operands = 0 : i64, tpu.core_type = #tpu.core_type<tc>, window_params = [{transform_indices = @transform_0, window_bounds = array<i64: 64, 32>}, {pipeline_mode = #tpu.pipeline_mode<synchronous>, transform_indices = @transform_1, window_bounds = array<i64: 32, 64>}, {pipeline_mode = #tpu.pipeline_mode<synchronous>, transform_indices = @transform_2, window_bounds = array<i64: 1, 64>}, {pipeline_mode = #tpu.pipeline_mode<synchronous>, transform_indices = @transform_3, window_bounds = array<i64: 64, 32>}, {pipeline_mode = #tpu.pipeline_mode<synchronous>, transform_indices = @transform_4, window_bounds = array<i64: 1, 32>}, {pipeline_mode = #tpu.pipeline_mode<synchronous>, transform_indices = @transform_5, window_bounds = array<i64: 32, 4>}, {pipeline_mode = #tpu.pipeline_mode<synchronous>, transform_indices = @transform_6, window_bounds = array<i64: 1, 4>}, {transform_indices = @transform_7, window_bounds = array<i64: 64, 4>}]} {
    %c0 = arith.constant 0 : index
    %c0_0 = arith.constant 0 : index
    %0 = vector.load %arg1[%c0, %c0_0] : memref<64x32xbf16, #tpu.memory_space<vmem>>, vector<64x32xbf16>
    %c0_1 = arith.constant 0 : index
    %c0_2 = arith.constant 0 : index
    %1 = vector.load %arg2[%c0_1, %c0_2] : memref<32x64xbf16, #tpu.memory_space<vmem>>, vector<32x64xbf16>
    %cst = arith.constant dense<0.000000e+00> : vector<64x64xf32>
    %2 = tpu.matmul %0, %1, %cst {dimension_numbers = #tpu.dot_dimension_numbers<[1], [0], [0], [1], [0, 0, 1, 1], [], []>} : vector<64x32xbf16>, vector<32x64xbf16>, vector<64x64xf32> -> vector<64x64xf32>
    %c0_3 = arith.constant 0 : index
    %c0_4 = arith.constant 0 : index
    %3 = vector.load %arg3[%c0_3, %c0_4] : memref<1x64xf32, #tpu.memory_space<vmem>>, vector<1x64xf32>
    %4 = vector.broadcast %3 : vector<1x64xf32> to vector<64x64xf32>
    %5 = arith.addf %2, %4 : vector<64x64xf32>
    %cst_5 = arith.constant 0.000000e+00 : f32
    %6 = vector.broadcast %cst_5 : f32 to vector<64x64xf32>
    %7 = arith.maximumf %5, %6 : vector<64x64xf32>
    %8 = arith.truncf %7 : vector<64x64xf32> to vector<64x64xbf16>
    %c0_6 = arith.constant 0 : index
    %c0_7 = arith.constant 0 : index
    %9 = vector.load %arg4[%c0_6, %c0_7] : memref<64x32xbf16, #tpu.memory_space<vmem>>, vector<64x32xbf16>
    %cst_8 = arith.constant dense<0.000000e+00> : vector<64x32xf32>
    %10 = tpu.matmul %8, %9, %cst_8 {dimension_numbers = #tpu.dot_dimension_numbers<[1], [0], [0], [1], [0, 0, 1, 1], [], []>} : vector<64x64xbf16>, vector<64x32xbf16>, vector<64x32xf32> -> vector<64x32xf32>
    %c0_9 = arith.constant 0 : index
    %c0_10 = arith.constant 0 : index
    %11 = vector.load %arg5[%c0_9, %c0_10] : memref<1x32xf32, #tpu.memory_space<vmem>>, vector<1x32xf32>
    %12 = vector.broadcast %11 : vector<1x32xf32> to vector<64x32xf32>
    %13 = arith.addf %10, %12 : vector<64x32xf32>
    %cst_11 = arith.constant 0.000000e+00 : f32
    %14 = vector.broadcast %cst_11 : f32 to vector<64x32xf32>
    %15 = arith.maximumf %13, %14 : vector<64x32xf32>
    %16 = arith.truncf %15 : vector<64x32xf32> to vector<64x32xbf16>
    %c0_12 = arith.constant 0 : index
    %c0_13 = arith.constant 0 : index
    %17 = vector.load %arg6[%c0_12, %c0_13] : memref<32x4xbf16, #tpu.memory_space<vmem>>, vector<32x4xbf16>
    %cst_14 = arith.constant dense<0.000000e+00> : vector<64x4xf32>
    %18 = tpu.matmul %16, %17, %cst_14 {dimension_numbers = #tpu.dot_dimension_numbers<[1], [0], [0], [1], [0, 0, 1, 1], [], []>} : vector<64x32xbf16>, vector<32x4xbf16>, vector<64x4xf32> -> vector<64x4xf32>
    %c0_15 = arith.constant 0 : index
    %c0_16 = arith.constant 0 : index
    %19 = vector.load %arg7[%c0_15, %c0_16] : memref<1x4xf32, #tpu.memory_space<vmem>>, vector<1x4xf32>
    %20 = vector.broadcast %19 : vector<1x4xf32> to vector<64x4xf32>
    %21 = arith.addf %18, %20 : vector<64x4xf32>
    %cst_17 = arith.constant dense<0xFF800000> : vector<64xf32>
    %22 = vector.multi_reduction <maximumf>, %21, %cst_17 [1] : vector<64x4xf32> to vector<64xf32>
    %23 = vector.shape_cast %22 : vector<64xf32> to vector<64x1xf32>
    %24 = vector.broadcast %23 : vector<64x1xf32> to vector<64x4xf32>
    %25 = arith.subf %21, %24 : vector<64x4xf32>
    %26 = math.exp %25 : vector<64x4xf32>
    %cst_18 = arith.constant dense<0.000000e+00> : vector<64xf32>
    %27 = vector.multi_reduction <add>, %26, %cst_18 [1] : vector<64x4xf32> to vector<64xf32>
    %28 = vector.shape_cast %27 : vector<64xf32> to vector<64x1xf32>
    %29 = math.log %28 : vector<64x1xf32>
    %30 = vector.broadcast %29 : vector<64x1xf32> to vector<64x4xf32>
    %31 = arith.subf %25, %30 : vector<64x4xf32>
    %c0_19 = arith.constant 0 : index
    %c0_20 = arith.constant 0 : index
    %32 = vector.load %arg8[%c0_19, %c0_20] : memref<64x4xf32, #tpu.memory_space<vmem>>, vector<64x4xf32>
    tpu.vector_store %arg8[%c0_19, %c0_20], %31 {strides = array<i32>} : memref<64x4xf32, #tpu.memory_space<vmem>>, vector<64x4xf32>,
    return
  }
  func.func @transform_0(%arg0: i32) -> (i32, i32) {
    %c0_i32 = arith.constant 0 : i32
    %c0_i32_0 = arith.constant 0 : i32
    return %arg0, %c0_i32 : i32, i32
  }
  func.func @transform_1(%arg0: i32) -> (i32, i32) {
    %c0_i32 = arith.constant 0 : i32
    %c0_i32_0 = arith.constant 0 : i32
    %c0_i32_1 = arith.constant 0 : i32
    return %c0_i32, %c0_i32_0 : i32, i32
  }
  func.func @transform_2(%arg0: i32) -> (i32, i32) {
    %c0_i32 = arith.constant 0 : i32
    %c0_i32_0 = arith.constant 0 : i32
    %c0_i32_1 = arith.constant 0 : i32
    return %c0_i32, %c0_i32_0 : i32, i32
  }
  func.func @transform_3(%arg0: i32) -> (i32, i32) {
    %c0_i32 = arith.constant 0 : i32
    %c0_i32_0 = arith.constant 0 : i32
    %c0_i32_1 = arith.constant 0 : i32
    return %c0_i32, %c0_i32_0 : i32, i32
  }
  func.func @transform_4(%arg0: i32) -> (i32, i32) {
    %c0_i32 = arith.constant 0 : i32
    %c0_i32_0 = arith.constant 0 : i32
    %c0_i32_1 = arith.constant 0 : i32
    return %c0_i32, %c0_i32_0 : i32, i32
  }
  func.func @transform_5(%arg0: i32) -> (i32, i32) {
    %c0_i32 = arith.constant 0 : i32
    %c0_i32_0 = arith.constant 0 : i32
    %c0_i32_1 = arith.constant 0 : i32
    return %c0_i32, %c0_i32_0 : i32, i32
  }
  func.func @transform_6(%arg0: i32) -> (i32, i32) {
    %c0_i32 = arith.constant 0 : i32
    %c0_i32_0 = arith.constant 0 : i32
    %c0_i32_1 = arith.constant 0 : i32
    return %c0_i32, %c0_i32_0 : i32, i32
  }
  func.func @transform_7(%arg0: i32) -> (i32, i32) {
    %c0_i32 = arith.constant 0 : i32
    %c0_i32_0 = arith.constant 0 : i32
    return %arg0, %c0_i32 : i32, i32
  }
}

</mosaic_0001>

<llo_original>
// kernel: tpu_custom_call.1
$region0: #{tpu_custom_call.1}
  #allocation0 [shape = 'u32[]', space=smem, size = 0x4, offset = 0x4, fixed_abs, tag = 'smem constant byte address 0x4 - core index']
  #allocation1 [shape = 'u32[144,128]{1,0:T(1,128)}', space=vmem, size = 0x12000, scoped, tag = 'internal scratch']
  %s0 = inlined_call_operand.vmem [shape: bf16[64,32], index: 0, kind: input, shape index: {}]
  %s1 = inlined_call_operand.vmem [shape: bf16[32,64], index: 1, kind: input, shape index: {}]
  %s2 = inlined_call_operand.vmem [shape: f32[1,64], index: 2, kind: input, shape index: {}]
  %s3 = inlined_call_operand.vmem [shape: bf16[64,32], index: 3, kind: input, shape index: {}]
  %s4 = inlined_call_operand.vmem [shape: f32[1,32], index: 4, kind: input, shape index: {}]
  %s5 = inlined_call_operand.vmem [shape: bf16[32,4], index: 5, kind: input, shape index: {}]
  %s6 = inlined_call_operand.vmem [shape: f32[1,4], index: 6, kind: input, shape index: {}]
  %s7 = inlined_call_operand.vmem [shape: f32[64,4], index: 7, kind: output, shape index: {}]
  %s8 = sld [smem:[#allocation0]]
  $region38: #{tpu_custom_call.1} parent=0
    _
  %s10 = ssub.s32 1, %s8
  %s11 = scalar_select 0, %s10, %s8
  // Predicated region
  $region2: #{tpu_custom_call.1} parent=0 // pred_check
    _
  $region3: #{tpu_custom_call.1} parent=0 // pred_check_branch
    %13 = sbr.rel (0) target = $region5
  $region4: #{tpu_custom_call.1} parent=0 // pred_region
    _
  $region5: #{tpu_custom_call.1} parent=0 // pred_fallthru
    _
  // Predicated region
  $region6: #{tpu_custom_call.1} parent=0 // pred_check
    _
  $region7: #{tpu_custom_call.1} parent=0 // pred_check_branch
    %15 = sbr.rel (0) target = $region9
  $region8: #{tpu_custom_call.1} parent=0 // pred_region
    _
  $region9: #{tpu_custom_call.1} parent=0 // pred_fallthru
    _
  // Predicated region
  $region10: #{tpu_custom_call.1} parent=0 // pred_check
    _
  $region11: #{tpu_custom_call.1} parent=0 // pred_check_branch
    %17 = sbr.rel (0) target = $region13
  $region12: #{tpu_custom_call.1} parent=0 // pred_region
    _
  $region13: #{tpu_custom_call.1} parent=0 // pred_fallthru
    _
  // Predicated region
  $region14: #{tpu_custom_call.1} parent=0 // pred_check
    _
  $region15: #{tpu_custom_call.1} parent=0 // pred_check_branch
    %19 = sbr.rel (0) target = $region17
  $region16: #{tpu_custom_call.1} parent=0 // pred_region
    _
  $region17: #{tpu_custom_call.1} parent=0 // pred_fallthru
    _
  // Predicated region
  $region18: #{tpu_custom_call.1} parent=0 // pred_check
    _
  $region19: #{tpu_custom_call.1} parent=0 // pred_check_branch
    %21 = sbr.rel (0) target = $region21
  $region20: #{tpu_custom_call.1} parent=0 // pred_region
    _
  $region21: #{tpu_custom_call.1} parent=0 // pred_fallthru
    _
  // Predicated region
  $region22: #{tpu_custom_call.1} parent=0 // pred_check
    _
  $region23: #{tpu_custom_call.1} parent=0 // pred_check_branch
    %23 = sbr.rel (0) target = $region25
  $region24: #{tpu_custom_call.1} parent=0 // pred_region
    _
  $region25: #{tpu_custom_call.1} parent=0 // pred_fallthru
    _
  // Predicated region
  $region26: #{tpu_custom_call.1} parent=0 // pred_check
    _
  $region27: #{tpu_custom_call.1} parent=0 // pred_check_branch
    %25 = sbr.rel (0) target = $region29
  $region28: #{tpu_custom_call.1} parent=0 // pred_region
    _
  $region29: #{tpu_custom_call.1} parent=0 // pred_fallthru
    _
  %v27 = vld [vmem:[%s0] sm:$0xf]
  %v28 = vld [vmem:[%s0 + $0x4] sm:$0xf]
  %v29 = vld [vmem:[%s0 + $0x8] sm:$0xf]
  %v30 = vld [vmem:[%s0 + $0xc] sm:$0xf]
  %v31 = vld [vmem:[%s0 + $0x10] sm:$0xf]
  %v32 = vld [vmem:[%s0 + $0x14] sm:$0xf]
  %v33 = vld [vmem:[%s0 + $0x18] sm:$0xf]
  %v34 = vld [vmem:[%s0 + $0x1c] sm:$0xf]
  %v35 = vld [vmem:[%s1] sm:$0xf]
  %v36 = vld [vmem:[%s1 + $0x4] sm:$0xf]
  %v37 = vld [vmem:[%s1 + $0x8] sm:$0xf]
  %v38 = vld [vmem:[%s1 + $0xc] sm:$0xf]
  %v39 = vld [vmem:[%s2] sm:$0x1]
  %v41 = vlaneseq
  %v42 = vshrl.u32 %v41, 7
  %v43 = vsub.s32 0, %v42
  %v44 = vrot.slane %v39, %v43
  %v54 = vunpack.c.l.b16 %v27
  %v55 = vunpack.c.l.b16 %v28
  %v56 = vunpack.c.l.b16 %v29
  %v57 = vunpack.c.l.b16 %v30
  %v58 = vunpack.c.l.b16 %v31
  %v59 = vunpack.c.l.b16 %v32
  %v60 = vunpack.c.l.b16 %v33
  %v61 = vunpack.c.l.b16 %v34
  %v62 = vpack.c.b16 %v55, %v54
  %v63 = vpack.c.b16 %v57, %v56
  %v64 = vpack.c.b16 %v59, %v58
  %v65 = vpack.c.b16 %v61, %v60
  %v70 = vunpack.c.l.b16 %v35
  %v71 = vunpack.c.l.b16 %v36
  %v72 = vunpack.c.l.b16 %v37
  %v73 = vunpack.c.l.b16 %v38
  %v74 = vpack.c.b16 %v71, %v70
  %v75 = vpack.c.b16 %v73, %v72
  %vm78 = vcmask 261120
  %v80 = vsel %vm78, %v62, 0
  %v83 = vsel %vm78, %v63, 0
  %v86 = vsel %vm78, %v64, 0
  %v89 = vsel %vm78, %v65, 0
  %91 = vmatprep.subr.bf16.mxu0 0
  %92 = vmatpush1.bf16.msra.mxu0 0
  %93 = vmatprep.subr.bf16.mxu0 0
  %94 = vmatpush1.bf16.msra.mxu0 0
  %95 = vmatprep.subr.bf16.mxu0 0
  %96 = vmatpush1.bf16.msra.mxu0 0
  %97 = vmatprep.subr.bf16.mxu0 0
  %98 = vmatpush1.bf16.msra.mxu0 0
  %99 = vmatprep.subr.bf16.mxu0 0
  %100 = vmatpush1.bf16.msra.mxu0 0
  %101 = vmatprep.subr.bf16.mxu0 0
  %102 = vmatpush1.bf16.msra.mxu0 0
  %103 = vmatprep.subr.bf16.mxu0 0
  %104 = vmatpush1.bf16.msra.mxu0 %v75
  %105 = vmatprep.subr.bf16.mxu0 0
  %106 = vmatpush1.bf16.msra.mxu0 %v74
  %107 = vmatprep.subr.bf16.mxu0 0
  %108 = vmatpush2.bf16.msra.mxu0 0
  %109 = vmatprep.subr.bf16.mxu0 0
  %110 = vmatpush2.bf16.msra.mxu0 0
  %111 = vmatprep.subr.bf16.mxu0 0
  %112 = vmatpush2.bf16.msra.mxu0 0
  %113 = vmatprep.subr.bf16.mxu0 0
  %114 = vmatpush2.bf16.msra.mxu0 0
  %115 = vmatprep.subr.bf16.mxu0 0
  %116 = vmatpush2.bf16.msra.mxu0 0
  %117 = vmatprep.subr.bf16.mxu0 0
  %118 = vmatpush2.bf16.msra.mxu0 0
  %119 = vmatprep.subr.bf16.mxu0 0
  %120 = vmatpush2.bf16.msra.mxu0 0
  %121 = vmatprep.subr.bf16.mxu0 0
  %122 = vmatpush2.bf16.msra.mxu0 0
  %123 = vmatprep.mubr.bf16.mxu0 0
  %124 = vmatmul.mubr.bf16.gmra.mxu0 %v80
  %v125 = vpop.f32.mrf.mxu0
  %v126 = vadd.f32 %v44, %v125
  %v127 = vpop.f32.mrf.mxu0
  %v128 = vpop.f32.mrf.mxu0
  %v129 = vadd.f32 %v44, %v128
  %v130 = vpop.f32.mrf.mxu0
  %131 = vmatprep.mubr.bf16.mxu0 0
  %132 = vmatmul.mubr.bf16.gmra.mxu0 %v83
  %v133 = vpop.f32.mrf.mxu0
  %v134 = vadd.f32 %v44, %v133
  %v135 = vpop.f32.mrf.mxu0
  %v136 = vpop.f32.mrf.mxu0
  %v137 = vadd.f32 %v44, %v136
  %v138 = vpop.f32.mrf.mxu0
  %139 = vmatprep.mubr.bf16.mxu0 0
  %140 = vmatmul.mubr.bf16.gmra.mxu0 %v86
  %v141 = vpop.f32.mrf.mxu0
  %v142 = vadd.f32 %v44, %v141
  %v143 = vpop.f32.mrf.mxu0
  %v144 = vpop.f32.mrf.mxu0
  %v145 = vadd.f32 %v44, %v144
  %v146 = vpop.f32.mrf.mxu0
  %147 = vmatprep.mubr.bf16.mxu0 0
  %148 = vmatmul.mubr.bf16.gmra.mxu0 %v89
  %v149 = vpop.f32.mrf.mxu0
  %v150 = vadd.f32 %v44, %v149
  %v151 = vpop.f32.mrf.mxu0
  %v152 = vpop.f32.mrf.mxu0
  %v153 = vadd.f32 %v44, %v152
  %v154 = vpop.f32.mrf.mxu0
  %155 = vdwg.mxu0
  %v156 = vmax.f32 %v126, 0.0
  %v157 = vmax.f32 %v129, 0.0
  %v158 = vmax.f32 %v134, 0.0
  %v159 = vmax.f32 %v137, 0.0
  %v160 = vmax.f32 %v142, 0.0
  %v161 = vmax.f32 %v145, 0.0
  %v162 = vmax.f32 %v150, 0.0
  %v163 = vmax.f32 %v153, 0.0
  %v164 = vpack.c.bf16 %v157, %v156
  %v165 = vpack.c.bf16 %v159, %v158
  %v166 = vpack.c.bf16 %v161, %v160
  %v167 = vpack.c.bf16 %v163, %v162
  %v168 = vld [vmem:[%s3] sm:$0xf]
  %v169 = vld [vmem:[%s3 + $0x4] sm:$0xf]
  %v170 = vld [vmem:[%s3 + $0x8] sm:$0xf]
  %v171 = vld [vmem:[%s3 + $0xc] sm:$0xf]
  %v172 = vld [vmem:[%s3 + $0x10] sm:$0xf]
  %v173 = vld [vmem:[%s3 + $0x14] sm:$0xf]
  %v174 = vld [vmem:[%s3 + $0x18] sm:$0xf]
  %v175 = vld [vmem:[%s3 + $0x1c] sm:$0xf]
  %v176 = vld [vmem:[%s4] sm:$0x1]
  %v178 = vlaneseq
  %v179 = vshrl.u32 %v178, 7
  %v180 = vsub.s32 0, %v179
  %v181 = vrot.slane %v176, %v180
  %v191 = vunpack.c.l.b16 %v168
  %v192 = vunpack.c.l.b16 %v169
  %v193 = vunpack.c.l.b16 %v170
  %v194 = vunpack.c.l.b16 %v171
  %v195 = vunpack.c.l.b16 %v172
  %v196 = vunpack.c.l.b16 %v173
  %v197 = vunpack.c.l.b16 %v174
  %v198 = vunpack.c.l.b16 %v175
  %v199 = vpack.c.b16 %v192, %v191
  %v200 = vpack.c.b16 %v194, %v193
  %v201 = vpack.c.b16 %v196, %v195
  %v202 = vpack.c.b16 %v198, %v197
  %vm207 = vcmask 523264
  %v209 = vsel %vm207, %v164, 0
  %v212 = vsel %vm207, %v165, 0
  %v215 = vsel %vm207, %v166, 0
  %v218 = vsel %vm207, %v167, 0
  %220 = vmatprep.subr.bf16.mxu0 0
  %221 = vmatpush1.bf16.msra.mxu0 0
  %222 = vmatprep.subr.bf16.mxu0 0
  %223 = vmatpush1.bf16.msra.mxu0 0
  %224 = vmatprep.subr.bf16.mxu0 0
  %225 = vmatpush1.bf16.msra.mxu0 0
  %226 = vmatprep.subr.bf16.mxu0 0
  %227 = vmatpush1.bf16.msra.mxu0 0
  %228 = vmatprep.subr.bf16.mxu0 0
  %229 = vmatpush1.bf16.msra.mxu0 %v202
  %230 = vmatprep.subr.bf16.mxu0 0
  %231 = vmatpush1.bf16.msra.mxu0 %v201
  %232 = vmatprep.subr.bf16.mxu0 0
  %233 = vmatpush1.bf16.msra.mxu0 %v200
  %234 = vmatprep.subr.bf16.mxu0 0
  %235 = vmatpush1.bf16.msra.mxu0 %v199
  %236 = vmatprep.subr.bf16.mxu0 0
  %237 = vmatpush2.bf16.msra.mxu0 0
  %238 = vmatprep.subr.bf16.mxu0 0
  %239 = vmatpush2.bf16.msra.mxu0 0
  %240 = vmatprep.subr.bf16.mxu0 0
  %241 = vmatpush2.bf16.msra.mxu0 0
  %242 = vmatprep.subr.bf16.mxu0 0
  %243 = vmatpush2.bf16.msra.mxu0 0
  %244 = vmatprep.subr.bf16.mxu0 0
  %245 = vmatpush2.bf16.msra.mxu0 0
  %246 = vmatprep.subr.bf16.mxu0 0
  %247 = vmatpush2.bf16.msra.mxu0 0
  %248 = vmatprep.subr.bf16.mxu0 0
  %249 = vmatpush2.bf16.msra.mxu0 0
  %250 = vmatprep.subr.bf16.mxu0 0
  %251 = vmatpush2.bf16.msra.mxu0 0
  %252 = vmatprep.mubr.bf16.mxu0 0
  %253 = vmatmul.mubr.bf16.gmra.mxu0 %v209
  %v254 = vpop.f32.mrf.mxu0
  %v255 = vadd.f32 %v181, %v254
  %v256 = vpop.f32.mrf.mxu0
  %v257 = vpop.f32.mrf.mxu0
  %v258 = vadd.f32 %v181, %v257
  %v259 = vpop.f32.mrf.mxu0
  %260 = vmatprep.mubr.bf16.mxu0 0
  %261 = vmatmul.mubr.bf16.gmra.mxu0 %v212
  %v262 = vpop.f32.mrf.mxu0
  %v263 = vadd.f32 %v181, %v262
  %v264 = vpop.f32.mrf.mxu0
  %v265 = vpop.f32.mrf.mxu0
  %v266 = vadd.f32 %v181, %v265
  %v267 = vpop.f32.mrf.mxu0
  %268 = vmatprep.mubr.bf16.mxu0 0
  %269 = vmatmul.mubr.bf16.gmra.mxu0 %v215
  %v270 = vpop.f32.mrf.mxu0
  %v271 = vadd.f32 %v181, %v270
  %v272 = vpop.f32.mrf.mxu0
  %v273 = vpop.f32.mrf.mxu0
  %v274 = vadd.f32 %v181, %v273
  %v275 = vpop.f32.mrf.mxu0
  %276 = vmatprep.mubr.bf16.mxu0 0
  %277 = vmatmul.mubr.bf16.gmra.mxu0 %v218
  %v278 = vpop.f32.mrf.mxu0
  %v279 = vadd.f32 %v181, %v278
  %v280 = vpop.f32.mrf.mxu0
  %v281 = vpop.f32.mrf.mxu0
  %v282 = vadd.f32 %v181, %v281
  %v283 = vpop.f32.mrf.mxu0
  %284 = vdwg.mxu0
  %v285 = vmax.f32 %v255, 0.0
  %v286 = vmax.f32 %v258, 0.0
  %v287 = vmax.f32 %v263, 0.0
  %v288 = vmax.f32 %v266, 0.0
  %v289 = vmax.f32 %v271, 0.0
  %v290 = vmax.f32 %v274, 0.0
  %v291 = vmax.f32 %v279, 0.0
  %v292 = vmax.f32 %v282, 0.0
  %v293 = vpack.c.bf16 %v286, %v285
  %v294 = vpack.c.bf16 %v288, %v287
  %v295 = vpack.c.bf16 %v290, %v289
  %v296 = vpack.c.bf16 %v292, %v291
  %v297 = vld [vmem:[%s5] sm:$0xf]
  %v298 = vld [vmem:[%s5 + $0x4] sm:$0xf]
  %v299 = vld [vmem:[%s5 + $0x8] sm:$0xf]
  %v300 = vld [vmem:[%s5 + $0xc] sm:$0xf]
  %v301 = vld [vmem:[%s6] sm:$0x1]
  %v303 = vlaneseq
  %v304 = vshrl.u32 %v303, 7
  %v305 = vsub.s32 0, %v304
  %v306 = vrot.slane %v301, %v305
  %v312 = vunpack.c.l.b16 %v297
  %v313 = vunpack.c.l.b16 %v298
  %v314 = vunpack.c.l.b16 %v299
  %v315 = vunpack.c.l.b16 %v300
  %v316 = vpack.c.b16 %v313, %v312
  %v317 = vpack.c.b16 %v315, %v314
  %v321 = vsel %vm78, %v293, 0
  %v324 = vsel %vm78, %v294, 0
  %v327 = vsel %vm78, %v295, 0
  %v330 = vsel %vm78, %v296, 0
  %332 = vmatprep.subr.bf16.mxu0 0
  %333 = vmatpush1.bf16.msra.mxu0 0
  %334 = vmatprep.subr.bf16.mxu0 0
  %335 = vmatpush1.bf16.msra.mxu0 0
  %336 = vmatprep.subr.bf16.mxu0 0
  %337 = vmatpush1.bf16.msra.mxu0 0
  %338 = vmatprep.subr.bf16.mxu0 0
  %339 = vmatpush1.bf16.msra.mxu0 0
  %340 = vmatprep.subr.bf16.mxu0 0
  %341 = vmatpush1.bf16.msra.mxu0 0
  %342 = vmatprep.subr.bf16.mxu0 0
  %343 = vmatpush1.bf16.msra.mxu0 0
  %344 = vmatprep.subr.bf16.mxu0 0
  %345 = vmatpush1.bf16.msra.mxu0 %v317
  %346 = vmatprep.subr.bf16.mxu0 0
  %347 = vmatpush1.bf16.msra.mxu0 %v316
  %348 = vmatprep.subr.bf16.mxu0 0
  %349 = vmatpush2.bf16.msra.mxu0 0
  %350 = vmatprep.subr.bf16.mxu0 0
  %351 = vmatpush2.bf16.msra.mxu0 0
  %352 = vmatprep.subr.bf16.mxu0 0
  %353 = vmatpush2.bf16.msra.mxu0 0
  %354 = vmatprep.subr.bf16.mxu0 0
  %355 = vmatpush2.bf16.msra.mxu0 0
  %356 = vmatprep.subr.bf16.mxu0 0
  %357 = vmatpush2.bf16.msra.mxu0 0
  %358 = vmatprep.subr.bf16.mxu0 0
  %359 = vmatpush2.bf16.msra.mxu0 0
  %360 = vmatprep.subr.bf16.mxu0 0
  %361 = vmatpush2.bf16.msra.mxu0 0
  %362 = vmatprep.subr.bf16.mxu0 0
  %363 = vmatpush2.bf16.msra.mxu0 0
  %364 = vmatprep.mubr.bf16.mxu0 0
  %365 = vmatmul.mubr.bf16.gmra.mxu0 %v321
  %v366 = vpop.f32.mrf.mxu0
  %v367 = vadd.f32 %v306, %v366
  %v368 = vpop.f32.mrf.mxu0
  %v369 = vpop.f32.mrf.mxu0
  %v370 = vadd.f32 %v306, %v369
  %v371 = vpop.f32.mrf.mxu0
  %372 = vmatprep.mubr.bf16.mxu0 0
  %373 = vmatmul.mubr.bf16.gmra.mxu0 %v324
  %v374 = vpop.f32.mrf.mxu0
  %v375 = vadd.f32 %v306, %v374
  %v376 = vpop.f32.mrf.mxu0
  %v377 = vpop.f32.mrf.mxu0
  %v378 = vadd.f32 %v306, %v377
  %v379 = vpop.f32.mrf.mxu0
  %380 = vmatprep.mubr.bf16.mxu0 0
  %381 = vmatmul.mubr.bf16.gmra.mxu0 %v327
  %v382 = vpop.f32.mrf.mxu0
  %v383 = vadd.f32 %v306, %v382
  %v384 = vpop.f32.mrf.mxu0
  %v385 = vpop.f32.mrf.mxu0
  %v386 = vadd.f32 %v306, %v385
  %v387 = vpop.f32.mrf.mxu0
  %388 = vmatprep.mubr.bf16.mxu0 0
  %389 = vmatmul.mubr.bf16.gmra.mxu0 %v330
  %v390 = vpop.f32.mrf.mxu0
  %v391 = vadd.f32 %v306, %v390
  %v392 = vpop.f32.mrf.mxu0
  %v393 = vpop.f32.mrf.mxu0
  %v394 = vadd.f32 %v306, %v393
  %v395 = vpop.f32.mrf.mxu0
  %396 = vdwg.mxu0
  %vm397 = vcmask 31744
  %v398 = vsel %vm397, %v367, -inf
  %399 = vmax.xlane.f32.xlu0 %v398
  %v400 = vpop.xlane.xlu0 %399
  %v401 = vsel %vm397, %v370, -inf
  %402 = vmax.xlane.f32.xlu0 %v401
  %v403 = vpop.xlane.xlu0 %402
  %v404 = vsel %vm397, %v375, -inf
  %405 = vmax.xlane.f32.xlu0 %v404
  %v406 = vpop.xlane.xlu0 %405
  %v407 = vsel %vm397, %v378, -inf
  %408 = vmax.xlane.f32.xlu0 %v407
  %v409 = vpop.xlane.xlu0 %408
  %v410 = vsel %vm397, %v383, -inf
  %411 = vmax.xlane.f32.xlu0 %v410
  %v412 = vpop.xlane.xlu0 %411
  %v413 = vsel %vm397, %v386, -inf
  %414 = vmax.xlane.f32.xlu0 %v413
  %v415 = vpop.xlane.xlu0 %414
  %v416 = vsel %vm397, %v391, -inf
  %417 = vmax.xlane.f32.xlu0 %v416
  %v418 = vpop.xlane.xlu0 %417
  %v419 = vsel %vm397, %v394, -inf
  %420 = vmax.xlane.f32.xlu0 %v419
  %v421 = vpop.xlane.xlu0 %420
  %v422 = vsub.f32 %v367, %v400
  %v423 = vsub.f32 %v370, %v403
  %v424 = vsub.f32 %v375, %v406
  %v425 = vsub.f32 %v378, %v409
  %v426 = vsub.f32 %v383, %v412
  %v427 = vsub.f32 %v386, %v415
  %v428 = vsub.f32 %v391, %v418
  %v429 = vsub.f32 %v394, %v421
  %v430 = vmul.f32 %v422, 1.442695
  %v431 = vpow.pop %v430
  %v432 = vmul.f32 %v423, 1.442695
  %v433 = vpow.pop %v432
  %v434 = vmul.f32 %v424, 1.442695
  %v435 = vpow.pop %v434
  %v436 = vmul.f32 %v425, 1.442695
  %v437 = vpow.pop %v436
  %v438 = vmul.f32 %v426, 1.442695
  %v439 = vpow.pop %v438
  %v440 = vmul.f32 %v427, 1.442695
  %v441 = vpow.pop %v440
  %v442 = vmul.f32 %v428, 1.442695
  %v443 = vpow.pop %v442
  %v444 = vmul.f32 %v429, 1.442695
  %v445 = vpow.pop %v444
  %v446 = vsel %vm397, %v431, 0.0
  %447 = vadd.xlane.f32.xlu0 %v446
  %v448 = vpop.xlane.xlu0 %447
  %v449 = vsel %vm397, %v433, 0.0
  %450 = vadd.xlane.f32.xlu0 %v449
  %v451 = vpop.xlane.xlu0 %450
  %v452 = vsel %vm397, %v435, 0.0
  %453 = vadd.xlane.f32.xlu0 %v452
  %v454 = vpop.xlane.xlu0 %453
  %v455 = vsel %vm397, %v437, 0.0
  %456 = vadd.xlane.f32.xlu0 %v455
  %v457 = vpop.xlane.xlu0 %456
  %v458 = vsel %vm397, %v439, 0.0
  %459 = vadd.xlane.f32.xlu0 %v458
  %v460 = vpop.xlane.xlu0 %459
  %v461 = vsel %vm397, %v441, 0.0
  %462 = vadd.xlane.f32.xlu0 %v461
  %v463 = vpop.xlane.xlu0 %462
  %v464 = vsel %vm397, %v443, 0.0
  %465 = vadd.xlane.f32.xlu0 %v464
  %v466 = vpop.xlane.xlu0 %465
  %v467 = vsel %vm397, %v445, 0.0
  %468 = vadd.xlane.f32.xlu0 %v467
  %v469 = vpop.xlane.xlu0 %468
  %v470 = vlog2.pop %v448
  %v471 = vmul.f32 %v470, 0.6931472
  %v472 = vlog2.pop %v451
  %v473 = vmul.f32 %v472, 0.6931472
  %v474 = vlog2.pop %v454
  %v475 = vmul.f32 %v474, 0.6931472
  %v476 = vlog2.pop %v457
  %v477 = vmul.f32 %v476, 0.6931472
  %v478 = vlog2.pop %v460
  %v479 = vmul.f32 %v478, 0.6931472
  %v480 = vlog2.pop %v463
  %v481 = vmul.f32 %v480, 0.6931472
  %v482 = vlog2.pop %v466
  %v483 = vmul.f32 %v482, 0.6931472
  %v484 = vlog2.pop %v469
  %v485 = vmul.f32 %v484, 0.6931472
  %v486 = vsub.f32 %v422, %v471
  %v487 = vsub.f32 %v423, %v473
  %v488 = vsub.f32 %v424, %v475
  %v489 = vsub.f32 %v425, %v477
  %v490 = vsub.f32 %v426, %v479
  %v491 = vsub.f32 %v427, %v481
  %v492 = vsub.f32 %v428, %v483
  %v493 = vsub.f32 %v429, %v485
  %494 = vst.msk [vmem:[%s7] sm:$0xff] %vm397, %v486
  %495 = vst.msk [vmem:[%s7 + $0x8] sm:$0xff] %vm397, %v487
  %496 = vst.msk [vmem:[%s7 + $0x10] sm:$0xff] %vm397, %v488
  %497 = vst.msk [vmem:[%s7 + $0x18] sm:$0xff] %vm397, %v489
  %498 = vst.msk [vmem:[%s7 + $0x20] sm:$0xff] %vm397, %v490
  %499 = vst.msk [vmem:[%s7 + $0x28] sm:$0xff] %vm397, %v491
  %500 = vst.msk [vmem:[%s7 + $0x30] sm:$0xff] %vm397, %v492
  %501 = vst.msk [vmem:[%s7 + $0x38] sm:$0xff] %vm397, %v493
  // Predicated region
  $region30: #{tpu_custom_call.1} parent=0 // pred_check
    _
  $region31: #{tpu_custom_call.1} parent=0 // pred_check_branch
    %503 = sbr.rel (0) target = $region33
  $region32: #{tpu_custom_call.1} parent=0 // pred_region
    _
  $region33: #{tpu_custom_call.1} parent=0 // pred_fallthru
    _
  // Predicated region
  $region34: #{tpu_custom_call.1} parent=0 // pred_check
    _
  $region35: #{tpu_custom_call.1} parent=0 // pred_check_branch
    %505 = sbr.rel (0) target = $region37
  $region36: #{tpu_custom_call.1} parent=0 // pred_region
    _
  $region37: #{tpu_custom_call.1} parent=0 // pred_fallthru
    _

</llo_original>
